<compile_context>
chip_gen: v5e
topology: v5e:2x2
jax: 0.10.0
libtpu: 0.0.40
codegen_flags: <defaults>
</compile_context>

<pallas_src>
import jax
import jax.numpy as jnp
from jax.experimental import pallas as pl
from jax.experimental.pallas import tpu as pltpu


def _bottleneck_kernel(x_ref, w1_ref, sh1_ref, wt_ref, sh2_ref,
                       w3_ref, sh3_ref, o_ref):
    # Stage 1: 1x1x1 Conv3d (BN scale folded into w1) + shift + ReLU.
    h = jnp.dot(x_ref[...], w1_ref[...], preferred_element_type=jnp.float32)
    h = jnp.maximum(h + sh1_ref[...], 0.0)

    # Stage 2: ConvTranspose3d with stride == kernel_size -> all K taps are
    # independent pointwise matmuls fused into one matmul.
    y = jnp.dot(h, wt_ref[...], preferred_element_type=jnp.float32)
    y = jnp.maximum(y + sh2_ref[...], 0.0)

    # Stage 3: per-tap 1x1x1 Conv3d as one block-diagonal matmul, single
    # full-width (lane-dense) store.
    z = jnp.dot(y, w3_ref[...], preferred_element_type=jnp.float32)
    o_ref[...] = jnp.maximum(z + sh3_ref[...], 0.0)


def _blockdiag(m, n):
    """Block-diagonal matrix with n copies of m on the diagonal."""
    return jnp.kron(jnp.eye(n, dtype=m.dtype), m)


def bottleneck_transpose_conv_pallas(x, raw_params, eps=1e-5, tile_s=1024):
    """x: (N, Cin, D, H, W) float32 (NCDHW, same as PyTorch)."""
    (w1, b1, g1, be1, wt, bt, g2, be2, w3, b3, g3, be3) = raw_params
    N, Cin, D, H, W = x.shape
    Cmid = w1.shape[0]
    Cout = w3.shape[0]
    kd, kh, kw = wt.shape[2:]
    K = kd * kh * kw

    # Fold conv bias + eval-mode BatchNorm into per-channel scale/shift, then
    # fold the scale into the weight matrices (only shift stays in the kernel).
    sc1 = g1 / jnp.sqrt(1.0 + eps)
    sh1 = b1 * sc1 + be1
    sc2 = g2 / jnp.sqrt(1.0 + eps)
    sh2 = bt * sc2 + be2
    sc3 = g3 / jnp.sqrt(1.0 + eps)
    sh3 = b3 * sc3 + be3

    w1m = jnp.transpose(w1) * sc1[None, :]                             # (Cin, Cmid)
    wtm = jnp.transpose(wt, (0, 2, 3, 4, 1)).reshape(Cmid, K * Cmid)   # (Cmid, K*Cmid)
    wtm = wtm * jnp.tile(sc2, K)[None, :]
    w3m = jnp.transpose(w3) * sc3[None, :]                             # (Cmid, Cout)

    # Stage-3 as one block-diagonal matmul over the K taps.
    w3bd = _blockdiag(w3m, K)                                          # (K*Cmid, K*Cout)
    sh2t = jnp.tile(sh2, K)
    sh3t = jnp.tile(sh3, K)

    # Pack P consecutive spatial positions per row so the output row is
    # lane-dense (>= 128 lanes -> unmasked stores).
    S = N * D * H * W
    P = 2 if (S % 2 == 0 and K * Cout < 128) else 1
    W1p = _blockdiag(w1m, P)                                           # (P*Cin, P*Cmid)
    Wtp = _blockdiag(wtm, P)                                           # (P*Cmid, P*K*Cmid)
    W3p = _blockdiag(w3bd, P)                                          # (P*K*Cmid, P*K*Cout)
    sh1p = jnp.tile(sh1, P).reshape(1, P * Cmid)
    sh2p = jnp.tile(sh2t, P).reshape(1, P * K * Cmid)
    sh3p = jnp.tile(sh3t, P).reshape(1, P * K * Cout)

    # NCDHW -> (S/P, P*Cin); the packing itself is a free row-major reshape.
    # (Keeping the surrounding model channels-last would remove this transpose.)
    x2d = jnp.transpose(x, (0, 2, 3, 4, 1)).reshape(S // P, P * Cin)

    Sp = S // P
    # Large tiles (mem-bound kernel), but keep >= 2 grid steps when possible so
    # the "parallel" axis can shard across v7x's two TensorCores.
    t = min(tile_s, max(8, ((Sp + 1) // 2) // 8 * 8))
    g = pl.cdiv(Sp, t)
    Spad = g * t
    if Spad != Sp:
        x2d = jnp.pad(x2d, ((0, Spad - Sp), (0, 0)))

    out_p = pl.pallas_call(
        _bottleneck_kernel,
        out_shape=jax.ShapeDtypeStruct((Spad, P * K * Cout), jnp.float32),
        grid_spec=pltpu.PrefetchScalarGridSpec(
            num_scalar_prefetch=0,
            grid=(g,),
            in_specs=[
                pl.BlockSpec((t, P * Cin), lambda i: (i, 0)),
                pl.BlockSpec((P * Cin, P * Cmid), lambda i: (0, 0)),
                pl.BlockSpec((1, P * Cmid), lambda i: (0, 0)),
                pl.BlockSpec((P * Cmid, P * K * Cmid), lambda i: (0, 0)),
                pl.BlockSpec((1, P * K * Cmid), lambda i: (0, 0)),
                pl.BlockSpec((P * K * Cmid, P * K * Cout), lambda i: (0, 0)),
                pl.BlockSpec((1, P * K * Cout), lambda i: (0, 0)),
            ],
            out_specs=pl.BlockSpec((t, P * K * Cout), lambda i: (i, 0)),
        ),
        compiler_params=pltpu.CompilerParams(
            dimension_semantics=("parallel",)),
    )(x2d, W1p, sh1p, Wtp, sh2p, W3p, sh3p)

    # Un-pack (free row-major reshape) and scatter back to NCDHW with the
    # upsampled spatial dims.
    out2d = out_p[:Sp].reshape(S, K * Cout)
    out8 = out2d.reshape(N, D, H, W, kd, kh, kw, Cout)
    out = jnp.transpose(out8, (0, 7, 1, 4, 2, 5, 3, 6)).reshape(
        N, Cout, kd * D, kh * H, kw * W)
    return out


def reference_forward(x, raw_params, eps=1e-5):
    """Pure-JAX reference with explicit conv/BN/ReLU math (eval-mode BN)."""
    (w1, b1, g1, be1, wt, bt, g2, be2, w3, b3, g3, be3) = raw_params

    def bn(v, g, be):  # running_mean=0, running_var=1
        return v / jnp.sqrt(1.0 + eps) * g[None, :, None, None, None] \
            + be[None, :, None, None, None]

    h = jnp.einsum('ncdef,oc->nodef', x, w1) + b1[None, :, None, None, None]
    h = jnp.maximum(bn(h, g1, be1), 0.0)

    N, Cm, D, H, W = h.shape
    y = jnp.einsum('ncdef,copqr->nodpeqfr', h, wt).reshape(
        N, Cm, 2 * D, 2 * H, 2 * W)
    y = y + bt[None, :, None, None, None]
    y = jnp.maximum(bn(y, g2, be2), 0.0)

    z = jnp.einsum('ncdef,oc->nodef', y, w3) + b3[None, :, None, None, None]
    z = jnp.maximum(bn(z, g3, be3), 0.0)
    return z


if __name__ == "__main__":
    # Small shapes consistent with the module.
    N, Cin, D, H, W = 2, 8, 8, 8, 8
    compress = 2
    Cout = 8
    Cmid = Cin // compress
    eps = 1e-5

    key = jax.random.PRNGKey(0)
    keys = jax.random.split(key, 13)
    x = jax.random.normal(keys[0], (N, Cin, D, H, W), jnp.float32)

    # Deterministic parameter init (shapes match the PyTorch module).
    w1 = 0.2 * jax.random.normal(keys[1], (Cmid, Cin), jnp.float32)    # Conv3d 1x1x1
    b1 = 0.1 * jax.random.normal(keys[2], (Cmid,), jnp.float32)
    g1 = 1.0 + 0.1 * jax.random.normal(keys[3], (Cmid,), jnp.float32)  # BN gamma
    be1 = 0.1 * jax.random.normal(keys[4], (Cmid,), jnp.float32)       # BN beta
    wt = 0.2 * jax.random.normal(keys[5], (Cmid, Cmid, 2, 2, 2), jnp.float32)  # ConvTranspose3d
    bt = 0.1 * jax.random.normal(keys[6], (Cmid,), jnp.float32)
    g2 = 1.0 + 0.1 * jax.random.normal(keys[7], (Cmid,), jnp.float32)
    be2 = 0.1 * jax.random.normal(keys[8], (Cmid,), jnp.float32)
    w3 = 0.2 * jax.random.normal(keys[9], (Cout, Cmid), jnp.float32)   # Conv3d 1x1x1
    b3 = 0.1 * jax.random.normal(keys[10], (Cout,), jnp.float32)
    g3 = 1.0 + 0.1 * jax.random.normal(keys[11], (Cout,), jnp.float32)
    be3 = 0.1 * jax.random.normal(keys[12], (Cout,), jnp.float32)

    raw_params = (w1, b1, g1, be1, wt, bt, g2, be2, w3, b3, g3, be3)

    out = bottleneck_transpose_conv_pallas(x, raw_params, eps=eps)
    out = jax.block_until_ready(out)

    ref = reference_forward(x, raw_params, eps=eps)

    assert out.shape == (N, Cout, 2 * D, 2 * H, 2 * W), out.shape
    max_err = float(jnp.max(jnp.abs(out - ref)))
    assert jnp.allclose(out, ref, atol=1e-4, rtol=1e-4), max_err
    print("KERNEL_OK")
</pallas_src>

<mosaic_0001>
module attributes {stable_mosaic.version = 11 : i64} {
  func.func @_bottleneck_kernel(%arg0: i32, %arg1: memref<256x16xf32, #tpu.memory_space<vmem>>, %arg2: memref<16x8xf32, #tpu.memory_space<vmem>>, %arg3: memref<1x8xf32, #tpu.memory_space<vmem>>, %arg4: memref<8x64xf32, #tpu.memory_space<vmem>>, %arg5: memref<1x64xf32, #tpu.memory_space<vmem>>, %arg6: memref<64x128xf32, #tpu.memory_space<vmem>>, %arg7: memref<1x128xf32, #tpu.memory_space<vmem>>, %arg8: memref<256x128xf32, #tpu.memory_space<vmem>>) attributes {dimension_semantics = [#tpu.dimension_semantics<parallel>], iteration_bounds = array<i64: 2>, scalar_prefetch = 0 : i64, scratch_operands = 0 : i64, tpu.core_type = #tpu.core_type<tc>, window_params = [{transform_indices = @transform_0, window_bounds = array<i64: 256, 16>}, {pipeline_mode = #tpu.pipeline_mode<synchronous>, transform_indices = @transform_1, window_bounds = array<i64: 16, 8>}, {pipeline_mode = #tpu.pipeline_mode<synchronous>, transform_indices = @transform_2, window_bounds = array<i64: 1, 8>}, {pipeline_mode = #tpu.pipeline_mode<synchronous>, transform_indices = @transform_3, window_bounds = array<i64: 8, 64>}, {pipeline_mode = #tpu.pipeline_mode<synchronous>, transform_indices = @transform_4, window_bounds = array<i64: 1, 64>}, {pipeline_mode = #tpu.pipeline_mode<synchronous>, transform_indices = @transform_5, window_bounds = array<i64: 64, 128>}, {pipeline_mode = #tpu.pipeline_mode<synchronous>, transform_indices = @transform_6, window_bounds = array<i64: 1, 128>}, {transform_indices = @transform_7, window_bounds = array<i64: 256, 128>}]} {
    %c0 = arith.constant 0 : index
    %c0_0 = arith.constant 0 : index
    %0 = vector.load %arg1[%c0, %c0_0] : memref<256x16xf32, #tpu.memory_space<vmem>>, vector<256x16xf32>
    %c0_1 = arith.constant 0 : index
    %c0_2 = arith.constant 0 : index
    %1 = vector.load %arg2[%c0_1, %c0_2] : memref<16x8xf32, #tpu.memory_space<vmem>>, vector<16x8xf32>
    %cst = arith.constant dense<0.000000e+00> : vector<256x8xf32>
    %2 = tpu.matmul %0, %1, %cst {dimension_numbers = #tpu.dot_dimension_numbers<[1], [0], [0], [1], [0, 0, 1, 1], [], []>} : vector<256x16xf32>, vector<16x8xf32>, vector<256x8xf32> -> vector<256x8xf32>
    %c0_3 = arith.constant 0 : index
    %c0_4 = arith.constant 0 : index
    %3 = vector.load %arg3[%c0_3, %c0_4] : memref<1x8xf32, #tpu.memory_space<vmem>>, vector<1x8xf32>
    %4 = vector.broadcast %3 : vector<1x8xf32> to vector<256x8xf32>
    %5 = arith.addf %2, %4 : vector<256x8xf32>
    %cst_5 = arith.constant 0.000000e+00 : f32
    %6 = vector.broadcast %cst_5 : f32 to vector<256x8xf32>
    %7 = arith.maximumf %5, %6 : vector<256x8xf32>
    %c0_6 = arith.constant 0 : index
    %c0_7 = arith.constant 0 : index
    %8 = vector.load %arg4[%c0_6, %c0_7] : memref<8x64xf32, #tpu.memory_space<vmem>>, vector<8x64xf32>
    %cst_8 = arith.constant dense<0.000000e+00> : vector<256x64xf32>
    %9 = tpu.matmul %7, %8, %cst_8 {dimension_numbers = #tpu.dot_dimension_numbers<[1], [0], [0], [1], [0, 0, 1, 1], [], []>} : vector<256x8xf32>, vector<8x64xf32>, vector<256x64xf32> -> vector<256x64xf32>
    %c0_9 = arith.constant 0 : index
    %c0_10 = arith.constant 0 : index
    %10 = vector.load %arg5[%c0_9, %c0_10] : memref<1x64xf32, #tpu.memory_space<vmem>>, vector<1x64xf32>
    %11 = vector.broadcast %10 : vector<1x64xf32> to vector<256x64xf32>
    %12 = arith.addf %9, %11 : vector<256x64xf32>
    %cst_11 = arith.constant 0.000000e+00 : f32
    %13 = vector.broadcast %cst_11 : f32 to vector<256x64xf32>
    %14 = arith.maximumf %12, %13 : vector<256x64xf32>
    %c0_12 = arith.constant 0 : index
    %c0_13 = arith.constant 0 : index
    %15 = vector.load %arg6[%c0_12, %c0_13] : memref<64x128xf32, #tpu.memory_space<vmem>>, vector<64x128xf32>
    %cst_14 = arith.constant dense<0.000000e+00> : vector<256x128xf32>
    %16 = tpu.matmul %14, %15, %cst_14 {dimension_numbers = #tpu.dot_dimension_numbers<[1], [0], [0], [1], [0, 0, 1, 1], [], []>} : vector<256x64xf32>, vector<64x128xf32>, vector<256x128xf32> -> vector<256x128xf32>
    %c0_15 = arith.constant 0 : index
    %c0_16 = arith.constant 0 : index
    %17 = vector.load %arg7[%c0_15, %c0_16] : memref<1x128xf32, #tpu.memory_space<vmem>>, vector<1x128xf32>
    %18 = vector.broadcast %17 : vector<1x128xf32> to vector<256x128xf32>
    %19 = arith.addf %16, %18 : vector<256x128xf32>
    %cst_17 = arith.constant 0.000000e+00 : f32
    %20 = vector.broadcast %cst_17 : f32 to vector<256x128xf32>
    %21 = arith.maximumf %19, %20 : vector<256x128xf32>
    %c0_18 = arith.constant 0 : index
    %c0_19 = arith.constant 0 : index
    %22 = vector.load %arg8[%c0_18, %c0_19] : memref<256x128xf32, #tpu.memory_space<vmem>>, vector<256x128xf32>
    tpu.vector_store %arg8[%c0_18, %c0_19], %21 {strides = array<i32>} : memref<256x128xf32, #tpu.memory_space<vmem>>, vector<256x128xf32>,
    return
  }
  func.func @transform_0(%arg0: i32) -> (i32, i32) {
    %c0_i32 = arith.constant 0 : i32
    %c0_i32_0 = arith.constant 0 : i32
    return %arg0, %c0_i32 : i32, i32
  }
  func.func @transform_1(%arg0: i32) -> (i32, i32) {
    %c0_i32 = arith.constant 0 : i32
    %c0_i32_0 = arith.constant 0 : i32
    %c0_i32_1 = arith.constant 0 : i32
    return %c0_i32, %c0_i32_0 : i32, i32
  }
  func.func @transform_2(%arg0: i32) -> (i32, i32) {
    %c0_i32 = arith.constant 0 : i32
    %c0_i32_0 = arith.constant 0 : i32
    %c0_i32_1 = arith.constant 0 : i32
    return %c0_i32, %c0_i32_0 : i32, i32
  }
  func.func @transform_3(%arg0: i32) -> (i32, i32) {
    %c0_i32 = arith.constant 0 : i32
    %c0_i32_0 = arith.constant 0 : i32
    %c0_i32_1 = arith.constant 0 : i32
    return %c0_i32, %c0_i32_0 : i32, i32
  }
  func.func @transform_4(%arg0: i32) -> (i32, i32) {
    %c0_i32 = arith.constant 0 : i32
    %c0_i32_0 = arith.constant 0 : i32
    %c0_i32_1 = arith.constant 0 : i32
    return %c0_i32, %c0_i32_0 : i32, i32
  }
  func.func @transform_5(%arg0: i32) -> (i32, i32) {
    %c0_i32 = arith.constant 0 : i32
    %c0_i32_0 = arith.constant 0 : i32
    %c0_i32_1 = arith.constant 0 : i32
    return %c0_i32, %c0_i32_0 : i32, i32
  }
  func.func @transform_6(%arg0: i32) -> (i32, i32) {
    %c0_i32 = arith.constant 0 : i32
    %c0_i32_0 = arith.constant 0 : i32
    %c0_i32_1 = arith.constant 0 : i32
    return %c0_i32, %c0_i32_0 : i32, i32
  }
  func.func @transform_7(%arg0: i32) -> (i32, i32) {
    %c0_i32 = arith.constant 0 : i32
    %c0_i32_0 = arith.constant 0 : i32
    return %arg0, %c0_i32 : i32, i32
  }
}

</mosaic_0001>

<llo_original>
// kernel: tpu_custom_call.1
$region0: #{tpu_custom_call.1}
  #allocation0 [shape = 'u32[]', space=smem, size = 0x4, offset = 0x4, fixed_abs, tag = 'smem constant byte address 0x4 - core index']
  #allocation1 [shape = 'u32[72,128]{1,0:T(1,128)}', space=vmem, size = 0x9000, scoped, tag = 'internal scratch']
  %s0 = inlined_call_operand.vmem [shape: f32[512,16], index: 0, kind: input, shape index: {}]
  %s1 = inlined_call_operand.vmem [shape: f32[16,8], index: 1, kind: input, shape index: {}]
  %s2 = inlined_call_operand.vmem [shape: f32[1,8], index: 2, kind: input, shape index: {}]
  %s3 = inlined_call_operand.vmem [shape: f32[8,64], index: 3, kind: input, shape index: {}]
  %s4 = inlined_call_operand.vmem [shape: f32[1,64], index: 4, kind: input, shape index: {}]
  %s5 = inlined_call_operand.vmem [shape: f32[64,128], index: 5, kind: input, shape index: {}]
  %s6 = inlined_call_operand.vmem [shape: f32[1,128], index: 6, kind: input, shape index: {}]
  %s7 = inlined_call_operand.hbm [shape: f32[512,128], index: 7, kind: output, shape index: {}]
  %s8 = sld [smem:[#allocation0]]
  $region61: #{tpu_custom_call.1} parent=0
    _
  %s10 = ssub.s32 1, %s8
  %s11 = scalar_select 0, %s10, %s8
  $region1: #{tpu_custom_call.1} parent=0
    #allocation2 [shape = 'u8[262144]{0}', space=vmem, size = 0x40000, scoped, tag = 'output window, operand 0']
    #allocation3 [shape = 's32[2]{0}', space=sflag, size = 0x8, scoped, tag = 'scoped memory for tpu_custom_call.1']
    %12 = vsyncpa [#allocation3], 0
    %s13 = scalar_lea.sflag [#allocation3], 1
    %14 = vsyncpa %s13, 0
    loop: start=0, step=1, limit=4
    $region2: #{tpu_custom_call.1} parent=1 // loop_pre_header
      _
    $region3: #{tpu_custom_call.1} parent=1 // loop_header
      %s16 = sphi 0, %s20
      %p17 = scmp.ge.s32.totalorder %s16, 4
      %s26 = sphi 0, %s28
      %s29 = sphi 0, %s26
      %s30 = sphi 0, %s29
      %s46 = sphi 0, %s30
      %s50 = sphi 0, %s50
      %s52 = sphi 0, %s50
      %s53 = sphi 0, %s52
      %s67 = sphi 0, %s53
      %s71 = sphi 0, %s71
      %s73 = sphi 0, %s71
      %s74 = sphi 0, %s73
      %s88 = sphi 0, %s74
      %s92 = sphi 0, %s92
      %s94 = sphi 0, %s92
      %s95 = sphi 0, %s94
      %s109 = sphi 0, %s95
      %s113 = sphi 0, %s113
      %s115 = sphi 0, %s113
      %s116 = sphi 0, %s115
      %s130 = sphi 0, %s116
      %s134 = sphi 0, %s134
      %s136 = sphi 0, %s134
      %s137 = sphi 0, %s136
      %s151 = sphi 0, %s137
      %s155 = sphi 0, %s155
      %s157 = sphi 0, %s155
      %s158 = sphi 0, %s157
      %s172 = sphi 0, %s158
      %s178 = sphi 0, %s180
      %s181 = sphi 0, %s178
      %s182 = sphi 0, %s181
      %s198 = sphi 0, %s182
    $region4: #{tpu_custom_call.1} parent=1 // loop_header_branch
      %19 = sbr.rel (%p17) target = $region8
    $region5: #{tpu_custom_call.1} parent=1 // loop_body
      %s21 = ssub.s32 %s16, 1
      %s22 = ssub.s32 %s16, 2
      %s23 = sadd.s32 %s16, 1
      %s24 = ssub.s32 %s16, %s23
      %p25 = scmp.eq.s32.totalorder %s24, 0
      %s27 = sadd.s32 %s26, 1
      %s28 = scalar_select %p25, %s26, %s27
      %p31 = pneg %p25
      %p32 = scmp.eq.s32.totalorder %s16, 1
      %p33 = por %p31, %p32
      %p34 = scmp.ne.s32.totalorder %s26, %s29
      %p35 = scmp.eq.s32.totalorder %s16, 0
      %p36 = por %p34, %p35
      %p37 = scmp.ne.s32.totalorder %s26, %s29
      %p38 = scmp.eq.s32.totalorder %s21, 1
      %p39 = por %p37, %p38
      %p40 = scmp.ne.s32.totalorder %s29, %s30
      %p41 = scmp.eq.s32.totalorder %s21, 0
      %p42 = por %p40, %p41
      %p43 = scmp.ne.s32.totalorder %s29, %s30
      %p44 = scmp.eq.s32.totalorder %s22, 1
      %p45 = por %p43, %p44
      %p47 = scmp.ne.s32.totalorder %s30, %s46
      %p48 = scmp.eq.s32.totalorder %s22, 0
      %p49 = por %p47, %p48
      %s51 = sadd.s32 %s50, 1
      %p54 = scmp.eq.s32.totalorder %s16, 1
      %p55 = scmp.ne.s32.totalorder %s50, %s52
      %p56 = scmp.eq.s32.totalorder %s16, 0
      %p57 = por %p55, %p56
      %p58 = scmp.ne.s32.totalorder %s50, %s52
      %p59 = scmp.eq.s32.totalorder %s21, 1
      %p60 = por %p58, %p59
      %p61 = scmp.ne.s32.totalorder %s52, %s53
      %p62 = scmp.eq.s32.totalorder %s21, 0
      %p63 = por %p61, %p62
      %p64 = scmp.ne.s32.totalorder %s52, %s53
      %p65 = scmp.eq.s32.totalorder %s22, 1
      %p66 = por %p64, %p65
      %p68 = scmp.ne.s32.totalorder %s53, %s67
      %p69 = scmp.eq.s32.totalorder %s22, 0
      %p70 = por %p68, %p69
      %s72 = sadd.s32 %s71, 1
      %p75 = scmp.eq.s32.totalorder %s16, 1
      %p76 = scmp.ne.s32.totalorder %s71, %s73
      %p77 = scmp.eq.s32.totalorder %s16, 0
      %p78 = por %p76, %p77
      %p79 = scmp.ne.s32.totalorder %s71, %s73
      %p80 = scmp.eq.s32.totalorder %s21, 1
      %p81 = por %p79, %p80
      %p82 = scmp.ne.s32.totalorder %s73, %s74
      %p83 = scmp.eq.s32.totalorder %s21, 0
      %p84 = por %p82, %p83
      %p85 = scmp.ne.s32.totalorder %s73, %s74
      %p86 = scmp.eq.s32.totalorder %s22, 1
      %p87 = por %p85, %p86
      %p89 = scmp.ne.s32.totalorder %s74, %s88
      %p90 = scmp.eq.s32.totalorder %s22, 0
      %p91 = por %p89, %p90
      %s93 = sadd.s32 %s92, 1
      %p96 = scmp.eq.s32.totalorder %s16, 1
      %p97 = scmp.ne.s32.totalorder %s92, %s94
      %p98 = scmp.eq.s32.totalorder %s16, 0
      %p99 = por %p97, %p98
      %p100 = scmp.ne.s32.totalorder %s92, %s94
      %p101 = scmp.eq.s32.totalorder %s21, 1
      %p102 = por %p100, %p101
      %p103 = scmp.ne.s32.totalorder %s94, %s95
      %p104 = scmp.eq.s32.totalorder %s21, 0
      %p105 = por %p103, %p104
      %p106 = scmp.ne.s32.totalorder %s94, %s95
      %p107 = scmp.eq.s32.totalorder %s22, 1
      %p108 = por %p106, %p107
      %p110 = scmp.ne.s32.totalorder %s95, %s109
      %p111 = scmp.eq.s32.totalorder %s22, 0
      %p112 = por %p110, %p111
      %s114 = sadd.s32 %s113, 1
      %p117 = scmp.eq.s32.totalorder %s16, 1
      %p118 = scmp.ne.s32.totalorder %s113, %s115
      %p119 = scmp.eq.s32.totalorder %s16, 0
      %p120 = por %p118, %p119
      %p121 = scmp.ne.s32.totalorder %s113, %s115
      %p122 = scmp.eq.s32.totalorder %s21, 1
      %p123 = por %p121, %p122
      %p124 = scmp.ne.s32.totalorder %s115, %s116
      %p125 = scmp.eq.s32.totalorder %s21, 0
      %p126 = por %p124, %p125
      %p127 = scmp.ne.s32.totalorder %s115, %s116
      %p128 = scmp.eq.s32.totalorder %s22, 1
      %p129 = por %p127, %p128
      %p131 = scmp.ne.s32.totalorder %s116, %s130
      %p132 = scmp.eq.s32.totalorder %s22, 0
      %p133 = por %p131, %p132
      %s135 = sadd.s32 %s134, 1
      %p138 = scmp.eq.s32.totalorder %s16, 1
      %p139 = scmp.ne.s32.totalorder %s134, %s136
      %p140 = scmp.eq.s32.totalorder %s16, 0
      %p141 = por %p139, %p140
      %p142 = scmp.ne.s32.totalorder %s134, %s136
      %p143 = scmp.eq.s32.totalorder %s21, 1
      %p144 = por %p142, %p143
      %p145 = scmp.ne.s32.totalorder %s136, %s137
      %p146 = scmp.eq.s32.totalorder %s21, 0
      %p147 = por %p145, %p146
      %p148 = scmp.ne.s32.totalorder %s136, %s137
      %p149 = scmp.eq.s32.totalorder %s22, 1
      %p150 = por %p148, %p149
      %p152 = scmp.ne.s32.totalorder %s137, %s151
      %p153 = scmp.eq.s32.totalorder %s22, 0
      %p154 = por %p152, %p153
      %s156 = sadd.s32 %s155, 1
      %p159 = scmp.eq.s32.totalorder %s16, 1
      %p160 = scmp.ne.s32.totalorder %s155, %s157
      %p161 = scmp.eq.s32.totalorder %s16, 0
      %p162 = por %p160, %p161
      %p163 = scmp.ne.s32.totalorder %s155, %s157
      %p164 = scmp.eq.s32.totalorder %s21, 1
      %p165 = por %p163, %p164
      %p166 = scmp.ne.s32.totalorder %s157, %s158
      %p167 = scmp.eq.s32.totalorder %s21, 0
      %p168 = por %p166, %p167
      %p169 = scmp.ne.s32.totalorder %s157, %s158
      %p170 = scmp.eq.s32.totalorder %s22, 1
      %p171 = por %p169, %p170
      %p173 = scmp.ne.s32.totalorder %s158, %s172
      %p174 = scmp.eq.s32.totalorder %s22, 0
      %p175 = por %p173, %p174
      %s176 = ssub.s32 %s16, %s23
      %p177 = scmp.eq.s32.totalorder %s176, 0
      %s179 = sadd.s32 %s178, 1
      %s180 = scalar_select %p177, %s178, %s179
      %p183 = pneg %p177
      %p184 = scmp.eq.s32.totalorder %s16, 1
      %p185 = por %p183, %p184
      %p186 = scmp.ne.s32.totalorder %s178, %s181
      %p187 = scmp.eq.s32.totalorder %s16, 0
      %p188 = por %p186, %p187
      %p189 = scmp.ne.s32.totalorder %s178, %s181
      %p190 = scmp.eq.s32.totalorder %s21, 1
      %p191 = por %p189, %p190
      %p192 = scmp.ne.s32.totalorder %s181, %s182
      %p193 = scmp.eq.s32.totalorder %s21, 0
      %p194 = por %p192, %p193
      %p195 = scmp.ne.s32.totalorder %s181, %s182
      %p196 = scmp.eq.s32.totalorder %s22, 1
      %p197 = por %p195, %p196
      %p199 = scmp.ne.s32.totalorder %s182, %s198
      %p200 = scmp.eq.s32.totalorder %s22, 0
      %p201 = por %p199, %p200
      %p202 = scmp.le.s32.totalorder 1, %s16
      %p203 = scmp.lt.s32.totalorder %s16, 3
      %p204 = pnand %p202, %p203
      %p205 = pneg %p204
      // Predicated region
      $region9: #{tpu_custom_call.1} parent=5 // pred_check
        _
      $region10: #{tpu_custom_call.1} parent=5 // pred_check_branch
        %207 = sbr.rel (%p204) target = $region12
      $region11: #{tpu_custom_call.1} parent=5 // pred_region
        %s208 = ssub.s32 %s16, 1
        // Predicated region
        $region13: #{tpu_custom_call.1} parent=11 // pred_check
          %p209 = pneg %p63
        $region14: #{tpu_custom_call.1} parent=11 // pred_check_branch
          %211 = sbr.rel (%p209) target = $region16
        $region15: #{tpu_custom_call.1} parent=11 // pred_region
          _
        $region16: #{tpu_custom_call.1} parent=11 // pred_fallthru
          _
        // Predicated region
        $region17: #{tpu_custom_call.1} parent=11 // pred_check
          %p212 = pneg %p84
        $region18: #{tpu_custom_call.1} parent=11 // pred_check_branch
          %214 = sbr.rel (%p212) target = $region20
        $region19: #{tpu_custom_call.1} parent=11 // pred_region
          _
        $region20: #{tpu_custom_call.1} parent=11 // pred_fallthru
          _
        // Predicated region
        $region21: #{tpu_custom_call.1} parent=11 // pred_check
          %p215 = pneg %p105
        $region22: #{tpu_custom_call.1} parent=11 // pred_check_branch
          %217 = sbr.rel (%p215) target = $region24
        $region23: #{tpu_custom_call.1} parent=11 // pred_region
          _
        $region24: #{tpu_custom_call.1} parent=11 // pred_fallthru
          _
        // Predicated region
        $region25: #{tpu_custom_call.1} parent=11 // pred_check
          %p218 = pneg %p126
        $region26: #{tpu_custom_call.1} parent=11 // pred_check_branch
          %220 = sbr.rel (%p218) target = $region28
        $region27: #{tpu_custom_call.1} parent=11 // pred_region
          _
        $region28: #{tpu_custom_call.1} parent=11 // pred_fallthru
          _
        // Predicated region
        $region29: #{tpu_custom_call.1} parent=11 // pred_check
          %p221 = pneg %p147
        $region30: #{tpu_custom_call.1} parent=11 // pred_check_branch
          %223 = sbr.rel (%p221) target = $region32
        $region31: #{tpu_custom_call.1} parent=11 // pred_region
          _
        $region32: #{tpu_custom_call.1} parent=11 // pred_fallthru
          _
        // Predicated region
        $region33: #{tpu_custom_call.1} parent=11 // pred_check
          %p224 = pneg %p168
        $region34: #{tpu_custom_call.1} parent=11 // pred_check_branch
          %226 = sbr.rel (%p224) target = $region36
        $region35: #{tpu_custom_call.1} parent=11 // pred_region
          _
        $region36: #{tpu_custom_call.1} parent=11 // pred_fallthru
          _
      $region12: #{tpu_custom_call.1} parent=5 // pred_fallthru
        _
      %p227 = scmp.lt.s32.totalorder %s16, 2
      // Predicated region
      $region37: #{tpu_custom_call.1} parent=5 // pred_check
        %p228 = pneg %p227
      $region38: #{tpu_custom_call.1} parent=5 // pred_check_branch
        %230 = sbr.rel (%p228) target = $region40
      $region39: #{tpu_custom_call.1} parent=5 // pred_region
        // Predicated region
        $region41: #{tpu_custom_call.1} parent=39 // pred_check
          %p231 = pneg %p36
        $region42: #{tpu_custom_call.1} parent=39 // pred_check_branch
          %233 = sbr.rel (%p231) target = $region44
        $region43: #{tpu_custom_call.1} parent=39 // pred_region
          %s234 = smul.u32 32, %s16
          %p235 = scmp.lt.s32.totalorder %s234, 63
          %s236 = scalar_select %p235, %s234, 63
          %s237 = smul.addr %s236, 8
          %s238 = scalar_lea.vmem %s0, %s237
          %s239 = smul.u32 32, %s16
        $region44: #{tpu_custom_call.1} parent=39 // pred_fallthru
          _
      $region40: #{tpu_custom_call.1} parent=5 // pred_fallthru
        _
      %p240 = scmp.le.s32.totalorder 1, %s16
      %p241 = scmp.lt.s32.totalorder %s16, 3
      %p242 = pnand %p240, %p241
      %p243 = pneg %p242
      // Predicated region
      $region45: #{tpu_custom_call.1} parent=5 // pred_check
        _
      $region46: #{tpu_custom_call.1} parent=5 // pred_check_branch
        %245 = sbr.rel (%p242) target = $region48
      $region47: #{tpu_custom_call.1} parent=5 // pred_region
        %s246 = ssub.s32 %s16, 1
        %s247 = smul.u32 32, %s21
        %p248 = scmp.lt.s32.totalorder %s247, 63
        %s249 = scalar_select %p248, %s247, 63
        %s250 = smul.addr %s249, 8
        %s251 = scalar_lea.vmem %s0, %s250
        %p252 = pneg %p42
        %p253 = pneg %p39
        %p254 = pneg %p63
        %p255 = pneg %p60
        %p256 = pneg %p84
        %p257 = pneg %p81
        %p258 = pneg %p105
        %p259 = pneg %p102
        %p260 = pneg %p126
        %p261 = pneg %p123
        %p262 = pneg %p147
        %p263 = pneg %p144
        %p264 = pneg %p168
        %p265 = pneg %p165
        %p266 = pneg %p194
        %p267 = pneg %p191
        %s268 = sand.u32 %s181, 1
        %s269 = scalar_lea.sflag [#allocation3], %s268
        %s270 = sand.u32 %s181, 1
        %s271 = smul.addr %s270, 256
        %s272 = scalar_lea.vmem [#allocation2], %s271
        %s273 = smul.u32 32, %s21
        %p274 = scmp.lt.s32.totalorder %s273, 63
        %s275 = scalar_select %p274, %s273, 63
        %s276 = smul.addr %s275, 8
        %s277 = scalar_lea.vmem %s0, %s276
        %s278 = smul.u32 32, %s21
        %s279 = smul.u32 32, %s21
        %v280 = vld [vmem:[%s277] sm:$0xff]
        %v281 = vld [vmem:[%s277 + $0x8] sm:$0xff]
        %v282 = vld [vmem:[%s277 + $0x10] sm:$0xff]
        %v283 = vld [vmem:[%s277 + $0x18] sm:$0xff]
        %v284 = vld [vmem:[%s277 + $0x20] sm:$0xff]
        %v285 = vld [vmem:[%s277 + $0x28] sm:$0xff]
        %v286 = vld [vmem:[%s277 + $0x30] sm:$0xff]
        %v287 = vld [vmem:[%s277 + $0x38] sm:$0xff]
        %v288 = vld [vmem:[%s277 + $0x40] sm:$0xff]
        %v289 = vld [vmem:[%s277 + $0x48] sm:$0xff]
        %v290 = vld [vmem:[%s277 + $0x50] sm:$0xff]
        %v291 = vld [vmem:[%s277 + $0x58] sm:$0xff]
        %v292 = vld [vmem:[%s277 + $0x60] sm:$0xff]
        %v293 = vld [vmem:[%s277 + $0x68] sm:$0xff]
        %v294 = vld [vmem:[%s277 + $0x70] sm:$0xff]
        %v295 = vld [vmem:[%s277 + $0x78] sm:$0xff]
        %v296 = vld [vmem:[%s277 + $0x80] sm:$0xff]
        %v297 = vld [vmem:[%s277 + $0x88] sm:$0xff]
        %v298 = vld [vmem:[%s277 + $0x90] sm:$0xff]
        %v299 = vld [vmem:[%s277 + $0x98] sm:$0xff]
        %v300 = vld [vmem:[%s277 + $0xa0] sm:$0xff]
        %v301 = vld [vmem:[%s277 + $0xa8] sm:$0xff]
        %v302 = vld [vmem:[%s277 + $0xb0] sm:$0xff]
        %v303 = vld [vmem:[%s277 + $0xb8] sm:$0xff]
        %v304 = vld [vmem:[%s277 + $0xc0] sm:$0xff]
        %v305 = vld [vmem:[%s277 + $0xc8] sm:$0xff]
        %v306 = vld [vmem:[%s277 + $0xd0] sm:$0xff]
        %v307 = vld [vmem:[%s277 + $0xd8] sm:$0xff]
        %v308 = vld [vmem:[%s277 + $0xe0] sm:$0xff]
        %v309 = vld [vmem:[%s277 + $0xe8] sm:$0xff]
        %v310 = vld [vmem:[%s277 + $0xf0] sm:$0xff]
        %v311 = vld [vmem:[%s277 + $0xf8] sm:$0xff]
        %v312 = vld [vmem:[%s1] sm:$0xff]
        %v313 = vld [vmem:[%s1 + $0x8] sm:$0xff]
        %v314 = vld [vmem:[%s2] sm:$0x1]
        %v316 = vperm.slane %v314, 0
        %vm318 = vcmask 130048
        %v320 = vsel %vm318, %v280, 0
        %v323 = vsel %vm318, %v281, 0
        %v326 = vsel %vm318, %v282, 0
        %v329 = vsel %vm318, %v283, 0
        %v332 = vsel %vm318, %v284, 0
        %v335 = vsel %vm318, %v285, 0
        %v338 = vsel %vm318, %v286, 0
        %v341 = vsel %vm318, %v287, 0
        %v344 = vsel %vm318, %v288, 0
        %v347 = vsel %vm318, %v289, 0
        %v350 = vsel %vm318, %v290, 0
        %v353 = vsel %vm318, %v291, 0
        %v356 = vsel %vm318, %v292, 0
        %v359 = vsel %vm318, %v293, 0
        %v362 = vsel %vm318, %v294, 0
        %v365 = vsel %vm318, %v295, 0
        %v368 = vsel %vm318, %v296, 0
        %v371 = vsel %vm318, %v297, 0
        %v374 = vsel %vm318, %v298, 0
        %v377 = vsel %vm318, %v299, 0
        %v380 = vsel %vm318, %v300, 0
        %v383 = vsel %vm318, %v301, 0
        %v386 = vsel %vm318, %v302, 0
        %v389 = vsel %vm318, %v303, 0
        %v392 = vsel %vm318, %v304, 0
        %v395 = vsel %vm318, %v305, 0
        %v398 = vsel %vm318, %v306, 0
        %v401 = vsel %vm318, %v307, 0
        %v404 = vsel %vm318, %v308, 0
        %v407 = vsel %vm318, %v309, 0
        %v410 = vsel %vm318, %v310, 0
        %v413 = vsel %vm318, %v311, 0
        %415 = vmatpush.msra.mxu0 0.0
        %416 = vmatpush.msra.mxu0 0.0
        %417 = vmatpush.msra.mxu0 0.0
        %418 = vmatpush.msra.mxu0 0.0
        %419 = vmatpush.msra.mxu0 0.0
        %420 = vmatpush.msra.mxu0 0.0
        %421 = vmatpush.msra.mxu0 0.0
        %422 = vmatpush.msra.mxu0 0.0
        %423 = vmatpush.msra.mxu0 0.0
        %424 = vmatpush.msra.mxu0 0.0
        %425 = vmatpush.msra.mxu0 0.0
        %426 = vmatpush.msra.mxu0 0.0
        %427 = vmatpush.msra.mxu0 0.0
        %428 = vmatpush.msra.mxu0 0.0
        %429 = vmatpush.msra.mxu0 %v313
        %430 = vmatpush.msra.mxu0 %v312
        %431 = vmatmul.f32.gmra.mxu0 %v320
        %v432 = vpop.f32.mrf.mxu0
        %v433 = vadd.f32 %v316, %v432
        %434 = vmatmul.f32.gmra.mxu0 %v323
        %v435 = vpop.f32.mrf.mxu0
        %v436 = vadd.f32 %v316, %v435
        %437 = vmatmul.f32.gmra.mxu0 %v326
        %v438 = vpop.f32.mrf.mxu0
        %v439 = vadd.f32 %v316, %v438
        %440 = vmatmul.f32.gmra.mxu0 %v329
        %v441 = vpop.f32.mrf.mxu0
        %v442 = vadd.f32 %v316, %v441
        %443 = vmatmul.f32.gmra.mxu0 %v332
        %v444 = vpop.f32.mrf.mxu0
        %v445 = vadd.f32 %v316, %v444
        %446 = vmatmul.f32.gmra.mxu0 %v335
        %v447 = vpop.f32.mrf.mxu0
        %v448 = vadd.f32 %v316, %v447
        %449 = vmatmul.f32.gmra.mxu0 %v338
        %v450 = vpop.f32.mrf.mxu0
        %v451 = vadd.f32 %v316, %v450
        %452 = vmatmul.f32.gmra.mxu0 %v341
        %v453 = vpop.f32.mrf.mxu0
        %v454 = vadd.f32 %v316, %v453
        %455 = vmatmul.f32.gmra.mxu0 %v344
        %v456 = vpop.f32.mrf.mxu0
        %v457 = vadd.f32 %v316, %v456
        %458 = vmatmul.f32.gmra.mxu0 %v347
        %v459 = vpop.f32.mrf.mxu0
        %v460 = vadd.f32 %v316, %v459
        %461 = vmatmul.f32.gmra.mxu0 %v350
        %v462 = vpop.f32.mrf.mxu0
        %v463 = vadd.f32 %v316, %v462
        %464 = vmatmul.f32.gmra.mxu0 %v353
        %v465 = vpop.f32.mrf.mxu0
        %v466 = vadd.f32 %v316, %v465
        %467 = vmatmul.f32.gmra.mxu0 %v356
        %v468 = vpop.f32.mrf.mxu0
        %v469 = vadd.f32 %v316, %v468
        %470 = vmatmul.f32.gmra.mxu0 %v359
        %v471 = vpop.f32.mrf.mxu0
        %v472 = vadd.f32 %v316, %v471
        %473 = vmatmul.f32.gmra.mxu0 %v362
        %v474 = vpop.f32.mrf.mxu0
        %v475 = vadd.f32 %v316, %v474
        %476 = vmatmul.f32.gmra.mxu0 %v365
        %v477 = vpop.f32.mrf.mxu0
        %v478 = vadd.f32 %v316, %v477
        %479 = vmatmul.f32.gmra.mxu0 %v368
        %v480 = vpop.f32.mrf.mxu0
        %v481 = vadd.f32 %v316, %v480
        %482 = vmatmul.f32.gmra.mxu0 %v371
        %v483 = vpop.f32.mrf.mxu0
        %v484 = vadd.f32 %v316, %v483
        %485 = vmatmul.f32.gmra.mxu0 %v374
        %v486 = vpop.f32.mrf.mxu0
        %v487 = vadd.f32 %v316, %v486
        %488 = vmatmul.f32.gmra.mxu0 %v377
        %v489 = vpop.f32.mrf.mxu0
        %v490 = vadd.f32 %v316, %v489
        %491 = vmatmul.f32.gmra.mxu0 %v380
        %v492 = vpop.f32.mrf.mxu0
        %v493 = vadd.f32 %v316, %v492
        %494 = vmatmul.f32.gmra.mxu0 %v383
        %v495 = vpop.f32.mrf.mxu0
        %v496 = vadd.f32 %v316, %v495
        %497 = vmatmul.f32.gmra.mxu0 %v386
        %v498 = vpop.f32.mrf.mxu0
        %v499 = vadd.f32 %v316, %v498
        %500 = vmatmul.f32.gmra.mxu0 %v389
        %v501 = vpop.f32.mrf.mxu0
        %v502 = vadd.f32 %v316, %v501
        %503 = vmatmul.f32.gmra.mxu0 %v392
        %v504 = vpop.f32.mrf.mxu0
        %v505 = vadd.f32 %v316, %v504
        %506 = vmatmul.f32.gmra.mxu0 %v395
        %v507 = vpop.f32.mrf.mxu0
        %v508 = vadd.f32 %v316, %v507
        %509 = vmatmul.f32.gmra.mxu0 %v398
        %v510 = vpop.f32.mrf.mxu0
        %v511 = vadd.f32 %v316, %v510
        %512 = vmatmul.f32.gmra.mxu0 %v401
        %v513 = vpop.f32.mrf.mxu0
        %v514 = vadd.f32 %v316, %v513
        %515 = vmatmul.f32.gmra.mxu0 %v404
        %v516 = vpop.f32.mrf.mxu0
        %v517 = vadd.f32 %v316, %v516
        %518 = vmatmul.f32.gmra.mxu0 %v407
        %v519 = vpop.f32.mrf.mxu0
        %v520 = vadd.f32 %v316, %v519
        %521 = vmatmul.f32.gmra.mxu0 %v410
        %v522 = vpop.f32.mrf.mxu0
        %v523 = vadd.f32 %v316, %v522
        %524 = vmatmul.f32.gmra.mxu0 %v413
        %v525 = vpop.f32.mrf.mxu0
        %v526 = vadd.f32 %v316, %v525
        %527 = vdwg.mxu0
        %v528 = vmax.f32 %v433, 0.0
        %v529 = vmax.f32 %v436, 0.0
        %v530 = vmax.f32 %v439, 0.0
        %v531 = vmax.f32 %v442, 0.0
        %v532 = vmax.f32 %v445, 0.0
        %v533 = vmax.f32 %v448, 0.0
        %v534 = vmax.f32 %v451, 0.0
        %v535 = vmax.f32 %v454, 0.0
        %v536 = vmax.f32 %v457, 0.0
        %v537 = vmax.f32 %v460, 0.0
        %v538 = vmax.f32 %v463, 0.0
        %v539 = vmax.f32 %v466, 0.0
        %v540 = vmax.f32 %v469, 0.0
        %v541 = vmax.f32 %v472, 0.0
        %v542 = vmax.f32 %v475, 0.0
        %v543 = vmax.f32 %v478, 0.0
        %v544 = vmax.f32 %v481, 0.0
        %v545 = vmax.f32 %v484, 0.0
        %v546 = vmax.f32 %v487, 0.0
        %v547 = vmax.f32 %v490, 0.0
        %v548 = vmax.f32 %v493, 0.0
        %v549 = vmax.f32 %v496, 0.0
        %v550 = vmax.f32 %v499, 0.0
        %v551 = vmax.f32 %v502, 0.0
        %v552 = vmax.f32 %v505, 0.0
        %v553 = vmax.f32 %v508, 0.0
        %v554 = vmax.f32 %v511, 0.0
        %v555 = vmax.f32 %v514, 0.0
        %v556 = vmax.f32 %v517, 0.0
        %v557 = vmax.f32 %v520, 0.0
        %v558 = vmax.f32 %v523, 0.0
        %v559 = vmax.f32 %v526, 0.0
        %v560 = vld [vmem:[%s3] sm:$0xff]
        %v561 = vld [vmem:[%s4] sm:$0x1]
        %v563 = vperm.slane %v561, 0
        %vm565 = vcmask 64512
        %v567 = vsel %vm565, %v528, 0
        %v570 = vsel %vm565, %v529, 0
        %v573 = vsel %vm565, %v530, 0
        %v576 = vsel %vm565, %v531, 0
        %v579 = vsel %vm565, %v532, 0
        %v582 = vsel %vm565, %v533, 0
        %v585 = vsel %vm565, %v534, 0
        %v588 = vsel %vm565, %v535, 0
        %v591 = vsel %vm565, %v536, 0
        %v594 = vsel %vm565, %v537, 0
        %v597 = vsel %vm565, %v538, 0
        %v600 = vsel %vm565, %v539, 0
        %v603 = vsel %vm565, %v540, 0
        %v606 = vsel %vm565, %v541, 0
        %v609 = vsel %vm565, %v542, 0
        %v612 = vsel %vm565, %v543, 0
        %v615 = vsel %vm565, %v544, 0
        %v618 = vsel %vm565, %v545, 0
        %v621 = vsel %vm565, %v546, 0
        %v624 = vsel %vm565, %v547, 0
        %v627 = vsel %vm565, %v548, 0
        %v630 = vsel %vm565, %v549, 0
        %v633 = vsel %vm565, %v550, 0
        %v636 = vsel %vm565, %v551, 0
        %v639 = vsel %vm565, %v552, 0
        %v642 = vsel %vm565, %v553, 0
        %v645 = vsel %vm565, %v554, 0
        %v648 = vsel %vm565, %v555, 0
        %v651 = vsel %vm565, %v556, 0
        %v654 = vsel %vm565, %v557, 0
        %v657 = vsel %vm565, %v558, 0
        %v660 = vsel %vm565, %v559, 0
        %662 = vmatpush.msra.mxu0 0.0
        %663 = vmatpush.msra.mxu0 0.0
        %664 = vmatpush.msra.mxu0 0.0
        %665 = vmatpush.msra.mxu0 0.0
        %666 = vmatpush.msra.mxu0 0.0
        %667 = vmatpush.msra.mxu0 0.0
        %668 = vmatpush.msra.mxu0 0.0
        %669 = vmatpush.msra.mxu0 0.0
        %670 = vmatpush.msra.mxu0 0.0
        %671 = vmatpush.msra.mxu0 0.0
        %672 = vmatpush.msra.mxu0 0.0
        %673 = vmatpush.msra.mxu0 0.0
        %674 = vmatpush.msra.mxu0 0.0
        %675 = vmatpush.msra.mxu0 0.0
        %676 = vmatpush.msra.mxu0 0.0
        %677 = vmatpush.msra.mxu0 %v560
        %678 = vmatmul.f32.gmra.mxu0 %v567
        %v679 = vpop.f32.mrf.mxu0
        %v680 = vadd.f32 %v563, %v679
        %681 = vmatmul.f32.gmra.mxu0 %v570
        %v682 = vpop.f32.mrf.mxu0
        %v683 = vadd.f32 %v563, %v682
        %684 = vmatmul.f32.gmra.mxu0 %v573
        %v685 = vpop.f32.mrf.mxu0
        %v686 = vadd.f32 %v563, %v685
        %687 = vmatmul.f32.gmra.mxu0 %v576
        %v688 = vpop.f32.mrf.mxu0
        %v689 = vadd.f32 %v563, %v688
        %690 = vmatmul.f32.gmra.mxu0 %v579
        %v691 = vpop.f32.mrf.mxu0
        %v692 = vadd.f32 %v563, %v691
        %693 = vmatmul.f32.gmra.mxu0 %v582
        %v694 = vpop.f32.mrf.mxu0
        %v695 = vadd.f32 %v563, %v694
        %696 = vmatmul.f32.gmra.mxu0 %v585
        %v697 = vpop.f32.mrf.mxu0
        %v698 = vadd.f32 %v563, %v697
        %699 = vmatmul.f32.gmra.mxu0 %v588
        %v700 = vpop.f32.mrf.mxu0
        %v701 = vadd.f32 %v563, %v700
        %702 = vmatmul.f32.gmra.mxu0 %v591
        %v703 = vpop.f32.mrf.mxu0
        %v704 = vadd.f32 %v563, %v703
        %705 = vmatmul.f32.gmra.mxu0 %v594
        %v706 = vpop.f32.mrf.mxu0
        %v707 = vadd.f32 %v563, %v706
        %708 = vmatmul.f32.gmra.mxu0 %v597
        %v709 = vpop.f32.mrf.mxu0
        %v710 = vadd.f32 %v563, %v709
        %711 = vmatmul.f32.gmra.mxu0 %v600
        %v712 = vpop.f32.mrf.mxu0
        %v713 = vadd.f32 %v563, %v712
        %714 = vmatmul.f32.gmra.mxu0 %v603
        %v715 = vpop.f32.mrf.mxu0
        %v716 = vadd.f32 %v563, %v715
        %717 = vmatmul.f32.gmra.mxu0 %v606
        %v718 = vpop.f32.mrf.mxu0
        %v719 = vadd.f32 %v563, %v718
        %720 = vmatmul.f32.gmra.mxu0 %v609
        %v721 = vpop.f32.mrf.mxu0
        %v722 = vadd.f32 %v563, %v721
        %723 = vmatmul.f32.gmra.mxu0 %v612
        %v724 = vpop.f32.mrf.mxu0
        %v725 = vadd.f32 %v563, %v724
        %726 = vmatmul.f32.gmra.mxu0 %v615
        %v727 = vpop.f32.mrf.mxu0
        %v728 = vadd.f32 %v563, %v727
        %729 = vmatmul.f32.gmra.mxu0 %v618
        %v730 = vpop.f32.mrf.mxu0
        %v731 = vadd.f32 %v563, %v730
        %732 = vmatmul.f32.gmra.mxu0 %v621
        %v733 = vpop.f32.mrf.mxu0
        %v734 = vadd.f32 %v563, %v733
        %735 = vmatmul.f32.gmra.mxu0 %v624
        %v736 = vpop.f32.mrf.mxu0
        %v737 = vadd.f32 %v563, %v736
        %738 = vmatmul.f32.gmra.mxu0 %v627
        %v739 = vpop.f32.mrf.mxu0
        %v740 = vadd.f32 %v563, %v739
        %741 = vmatmul.f32.gmra.mxu0 %v630
        %v742 = vpop.f32.mrf.mxu0
        %v743 = vadd.f32 %v563, %v742
        %744 = vmatmul.f32.gmra.mxu0 %v633
        %v745 = vpop.f32.mrf.mxu0
        %v746 = vadd.f32 %v563, %v745
        %747 = vmatmul.f32.gmra.mxu0 %v636
        %v748 = vpop.f32.mrf.mxu0
        %v749 = vadd.f32 %v563, %v748
        %750 = vmatmul.f32.gmra.mxu0 %v639
        %v751 = vpop.f32.mrf.mxu0
        %v752 = vadd.f32 %v563, %v751
        %753 = vmatmul.f32.gmra.mxu0 %v642
        %v754 = vpop.f32.mrf.mxu0
        %v755 = vadd.f32 %v563, %v754
        %756 = vmatmul.f32.gmra.mxu0 %v645
        %v757 = vpop.f32.mrf.mxu0
        %v758 = vadd.f32 %v563, %v757
        %759 = vmatmul.f32.gmra.mxu0 %v648
        %v760 = vpop.f32.mrf.mxu0
        %v761 = vadd.f32 %v563, %v760
        %762 = vmatmul.f32.gmra.mxu0 %v651
        %v763 = vpop.f32.mrf.mxu0
        %v764 = vadd.f32 %v563, %v763
        %765 = vmatmul.f32.gmra.mxu0 %v654
        %v766 = vpop.f32.mrf.mxu0
        %v767 = vadd.f32 %v563, %v766
        %768 = vmatmul.f32.gmra.mxu0 %v657
        %v769 = vpop.f32.mrf.mxu0
        %v770 = vadd.f32 %v563, %v769
        %771 = vmatmul.f32.gmra.mxu0 %v660
        %v772 = vpop.f32.mrf.mxu0
        %v773 = vadd.f32 %v563, %v772
        %774 = vdwg.mxu0
        %v775 = vmax.f32 %v680, 0.0
        %v776 = vmax.f32 %v683, 0.0
        %v777 = vmax.f32 %v686, 0.0
        %v778 = vmax.f32 %v689, 0.0
        %v779 = vmax.f32 %v692, 0.0
        %v780 = vmax.f32 %v695, 0.0
        %v781 = vmax.f32 %v698, 0.0
        %v782 = vmax.f32 %v701, 0.0
        %v783 = vmax.f32 %v704, 0.0
        %v784 = vmax.f32 %v707, 0.0
        %v785 = vmax.f32 %v710, 0.0
        %v786 = vmax.f32 %v713, 0.0
        %v787 = vmax.f32 %v716, 0.0
        %v788 = vmax.f32 %v719, 0.0
        %v789 = vmax.f32 %v722, 0.0
        %v790 = vmax.f32 %v725, 0.0
        %v791 = vmax.f32 %v728, 0.0
        %v792 = vmax.f32 %v731, 0.0
        %v793 = vmax.f32 %v734, 0.0
        %v794 = vmax.f32 %v737, 0.0
        %v795 = vmax.f32 %v740, 0.0
        %v796 = vmax.f32 %v743, 0.0
        %v797 = vmax.f32 %v746, 0.0
        %v798 = vmax.f32 %v749, 0.0
        %v799 = vmax.f32 %v752, 0.0
        %v800 = vmax.f32 %v755, 0.0
        %v801 = vmax.f32 %v758, 0.0
        %v802 = vmax.f32 %v761, 0.0
        %v803 = vmax.f32 %v764, 0.0
        %v804 = vmax.f32 %v767, 0.0
        %v805 = vmax.f32 %v770, 0.0
        %v806 = vmax.f32 %v773, 0.0
        %v807 = vld [vmem:[%s5] sm:$0xff]
        %v808 = vld [vmem:[%s5 + $0x8] sm:$0xff]
        %v809 = vld [vmem:[%s5 + $0x10] sm:$0xff]
        %v810 = vld [vmem:[%s5 + $0x18] sm:$0xff]
        %v811 = vld [vmem:[%s5 + $0x20] sm:$0xff]
        %v812 = vld [vmem:[%s5 + $0x28] sm:$0xff]
        %v813 = vld [vmem:[%s5 + $0x30] sm:$0xff]
        %v814 = vld [vmem:[%s5 + $0x38] sm:$0xff]
        %v815 = vld [vmem:[%s6] sm:$0x1]
        %v817 = vperm.slane %v815, 0
        %vm819 = vcmask 523264
        %v821 = vsel %vm819, %v775, 0
        %v824 = vsel %vm819, %v776, 0
        %v827 = vsel %vm819, %v777, 0
        %v830 = vsel %vm819, %v778, 0
        %v833 = vsel %vm819, %v779, 0
        %v836 = vsel %vm819, %v780, 0
        %v839 = vsel %vm819, %v781, 0
        %v842 = vsel %vm819, %v782, 0
        %v845 = vsel %vm819, %v783, 0
        %v848 = vsel %vm819, %v784, 0
        %v851 = vsel %vm819, %v785, 0
        %v854 = vsel %vm819, %v786, 0
        %v857 = vsel %vm819, %v787, 0
        %v860 = vsel %vm819, %v788, 0
        %v863 = vsel %vm819, %v789, 0
        %v866 = vsel %vm819, %v790, 0
        %v869 = vsel %vm819, %v791, 0
        %v872 = vsel %vm819, %v792, 0
        %v875 = vsel %vm819, %v793, 0
        %v878 = vsel %vm819, %v794, 0
        %v881 = vsel %vm819, %v795, 0
        %v884 = vsel %vm819, %v796, 0
        %v887 = vsel %vm819, %v797, 0
        %v890 = vsel %vm819, %v798, 0
        %v893 = vsel %vm819, %v799, 0
        %v896 = vsel %vm819, %v800, 0
        %v899 = vsel %vm819, %v801, 0
        %v902 = vsel %vm819, %v802, 0
        %v905 = vsel %vm819, %v803, 0
        %v908 = vsel %vm819, %v804, 0
        %v911 = vsel %vm819, %v805, 0
        %v914 = vsel %vm819, %v806, 0
        %916 = vmatpush.msra.mxu0 0.0
        %917 = vmatpush.msra.mxu0 0.0
        %918 = vmatpush.msra.mxu0 0.0
        %919 = vmatpush.msra.mxu0 0.0
        %920 = vmatpush.msra.mxu0 0.0
        %921 = vmatpush.msra.mxu0 0.0
        %922 = vmatpush.msra.mxu0 0.0
        %923 = vmatpush.msra.mxu0 0.0
        %924 = vmatpush.msra.mxu0 %v814
        %925 = vmatpush.msra.mxu0 %v813
        %926 = vmatpush.msra.mxu0 %v812
        %927 = vmatpush.msra.mxu0 %v811
        %928 = vmatpush.msra.mxu0 %v810
        %929 = vmatpush.msra.mxu0 %v809
        %930 = vmatpush.msra.mxu0 %v808
        %931 = vmatpush.msra.mxu0 %v807
        %932 = vmatmul.f32.gmra.mxu0 %v821
        %v933 = vpop.f32.mrf.mxu0
        %v934 = vadd.f32 %v817, %v933
        %935 = vmatmul.f32.gmra.mxu0 %v824
        %v936 = vpop.f32.mrf.mxu0
        %v937 = vadd.f32 %v817, %v936
        %938 = vmatmul.f32.gmra.mxu0 %v827
        %v939 = vpop.f32.mrf.mxu0
        %v940 = vadd.f32 %v817, %v939
        %941 = vmatmul.f32.gmra.mxu0 %v830
        %v942 = vpop.f32.mrf.mxu0
        %v943 = vadd.f32 %v817, %v942
        %944 = vmatmul.f32.gmra.mxu0 %v833
        %v945 = vpop.f32.mrf.mxu0
        %v946 = vadd.f32 %v817, %v945
        %947 = vmatmul.f32.gmra.mxu0 %v836
        %v948 = vpop.f32.mrf.mxu0
        %v949 = vadd.f32 %v817, %v948
        %950 = vmatmul.f32.gmra.mxu0 %v839
        %v951 = vpop.f32.mrf.mxu0
        %v952 = vadd.f32 %v817, %v951
        %953 = vmatmul.f32.gmra.mxu0 %v842
        %v954 = vpop.f32.mrf.mxu0
        %v955 = vadd.f32 %v817, %v954
        %956 = vmatmul.f32.gmra.mxu0 %v845
        %v957 = vpop.f32.mrf.mxu0
        %v958 = vadd.f32 %v817, %v957
        %959 = vmatmul.f32.gmra.mxu0 %v848
        %v960 = vpop.f32.mrf.mxu0
        %v961 = vadd.f32 %v817, %v960
        %962 = vmatmul.f32.gmra.mxu0 %v851
        %v963 = vpop.f32.mrf.mxu0
        %v964 = vadd.f32 %v817, %v963
        %965 = vmatmul.f32.gmra.mxu0 %v854
        %v966 = vpop.f32.mrf.mxu0
        %v967 = vadd.f32 %v817, %v966
        %968 = vmatmul.f32.gmra.mxu0 %v857
        %v969 = vpop.f32.mrf.mxu0
        %v970 = vadd.f32 %v817, %v969
        %971 = vmatmul.f32.gmra.mxu0 %v860
        %v972 = vpop.f32.mrf.mxu0
        %v973 = vadd.f32 %v817, %v972
        %974 = vmatmul.f32.gmra.mxu0 %v863
        %v975 = vpop.f32.mrf.mxu0
        %v976 = vadd.f32 %v817, %v975
        %977 = vmatmul.f32.gmra.mxu0 %v866
        %v978 = vpop.f32.mrf.mxu0
        %v979 = vadd.f32 %v817, %v978
        %980 = vmatmul.f32.gmra.mxu0 %v869
        %v981 = vpop.f32.mrf.mxu0
        %v982 = vadd.f32 %v817, %v981
        %983 = vmatmul.f32.gmra.mxu0 %v872
        %v984 = vpop.f32.mrf.mxu0
        %v985 = vadd.f32 %v817, %v984
        %986 = vmatmul.f32.gmra.mxu0 %v875
        %v987 = vpop.f32.mrf.mxu0
        %v988 = vadd.f32 %v817, %v987
        %989 = vmatmul.f32.gmra.mxu0 %v878
        %v990 = vpop.f32.mrf.mxu0
        %v991 = vadd.f32 %v817, %v990
        %992 = vmatmul.f32.gmra.mxu0 %v881
        %v993 = vpop.f32.mrf.mxu0
        %v994 = vadd.f32 %v817, %v993
        %995 = vmatmul.f32.gmra.mxu0 %v884
        %v996 = vpop.f32.mrf.mxu0
        %v997 = vadd.f32 %v817, %v996
        %998 = vmatmul.f32.gmra.mxu0 %v887
        %v999 = vpop.f32.mrf.mxu0
        %v1000 = vadd.f32 %v817, %v999
        %1001 = vmatmul.f32.gmra.mxu0 %v890
        %v1002 = vpop.f32.mrf.mxu0
        %v1003 = vadd.f32 %v817, %v1002
        %1004 = vmatmul.f32.gmra.mxu0 %v893
        %v1005 = vpop.f32.mrf.mxu0
        %v1006 = vadd.f32 %v817, %v1005
        %1007 = vmatmul.f32.gmra.mxu0 %v896
        %v1008 = vpop.f32.mrf.mxu0
        %v1009 = vadd.f32 %v817, %v1008
        %1010 = vmatmul.f32.gmra.mxu0 %v899
        %v1011 = vpop.f32.mrf.mxu0
        %v1012 = vadd.f32 %v817, %v1011
        %1013 = vmatmul.f32.gmra.mxu0 %v902
        %v1014 = vpop.f32.mrf.mxu0
        %v1015 = vadd.f32 %v817, %v1014
        %1016 = vmatmul.f32.gmra.mxu0 %v905
        %v1017 = vpop.f32.mrf.mxu0
        %v1018 = vadd.f32 %v817, %v1017
        %1019 = vmatmul.f32.gmra.mxu0 %v908
        %v1020 = vpop.f32.mrf.mxu0
        %v1021 = vadd.f32 %v817, %v1020
        %1022 = vmatmul.f32.gmra.mxu0 %v911
        %v1023 = vpop.f32.mrf.mxu0
        %v1024 = vadd.f32 %v817, %v1023
        %1025 = vmatmul.f32.gmra.mxu0 %v914
        %v1026 = vpop.f32.mrf.mxu0
        %v1027 = vadd.f32 %v817, %v1026
        %1028 = vdwg.mxu0
        %v1029 = vmax.f32 %v934, 0.0
        %v1030 = vmax.f32 %v937, 0.0
        %v1031 = vmax.f32 %v940, 0.0
        %v1032 = vmax.f32 %v943, 0.0
        %v1033 = vmax.f32 %v946, 0.0
        %v1034 = vmax.f32 %v949, 0.0
        %v1035 = vmax.f32 %v952, 0.0
        %v1036 = vmax.f32 %v955, 0.0
        %v1037 = vmax.f32 %v958, 0.0
        %v1038 = vmax.f32 %v961, 0.0
        %v1039 = vmax.f32 %v964, 0.0
        %v1040 = vmax.f32 %v967, 0.0
        %v1041 = vmax.f32 %v970, 0.0
        %v1042 = vmax.f32 %v973, 0.0
        %v1043 = vmax.f32 %v976, 0.0
        %v1044 = vmax.f32 %v979, 0.0
        %v1045 = vmax.f32 %v982, 0.0
        %v1046 = vmax.f32 %v985, 0.0
        %v1047 = vmax.f32 %v988, 0.0
        %v1048 = vmax.f32 %v991, 0.0
        %v1049 = vmax.f32 %v994, 0.0
        %v1050 = vmax.f32 %v997, 0.0
        %v1051 = vmax.f32 %v1000, 0.0
        %v1052 = vmax.f32 %v1003, 0.0
        %v1053 = vmax.f32 %v1006, 0.0
        %v1054 = vmax.f32 %v1009, 0.0
        %v1055 = vmax.f32 %v1012, 0.0
        %v1056 = vmax.f32 %v1015, 0.0
        %v1057 = vmax.f32 %v1018, 0.0
        %v1058 = vmax.f32 %v1021, 0.0
        %v1059 = vmax.f32 %v1024, 0.0
        %v1060 = vmax.f32 %v1027, 0.0
        %1061 = vst [vmem:[%s272] sm:$0xff] %v1029
        %1062 = vst [vmem:[%s272 + $0x8] sm:$0xff] %v1030
        %1063 = vst [vmem:[%s272 + $0x10] sm:$0xff] %v1031
        %1064 = vst [vmem:[%s272 + $0x18] sm:$0xff] %v1032
        %1065 = vst [vmem:[%s272 + $0x20] sm:$0xff] %v1033
        %1066 = vst [vmem:[%s272 + $0x28] sm:$0xff] %v1034
        %1067 = vst [vmem:[%s272 + $0x30] sm:$0xff] %v1035
        %1068 = vst [vmem:[%s272 + $0x38] sm:$0xff] %v1036
        %1069 = vst [vmem:[%s272 + $0x40] sm:$0xff] %v1037
        %1070 = vst [vmem:[%s272 + $0x48] sm:$0xff] %v1038
        %1071 = vst [vmem:[%s272 + $0x50] sm:$0xff] %v1039
        %1072 = vst [vmem:[%s272 + $0x58] sm:$0xff] %v1040
        %1073 = vst [vmem:[%s272 + $0x60] sm:$0xff] %v1041
        %1074 = vst [vmem:[%s272 + $0x68] sm:$0xff] %v1042
        %1075 = vst [vmem:[%s272 + $0x70] sm:$0xff] %v1043
        %1076 = vst [vmem:[%s272 + $0x78] sm:$0xff] %v1044
        %1077 = vst [vmem:[%s272 + $0x80] sm:$0xff] %v1045
        %1078 = vst [vmem:[%s272 + $0x88] sm:$0xff] %v1046
        %1079 = vst [vmem:[%s272 + $0x90] sm:$0xff] %v1047
        %1080 = vst [vmem:[%s272 + $0x98] sm:$0xff] %v1048
        %1081 = vst [vmem:[%s272 + $0xa0] sm:$0xff] %v1049
        %1082 = vst [vmem:[%s272 + $0xa8] sm:$0xff] %v1050
        %1083 = vst [vmem:[%s272 + $0xb0] sm:$0xff] %v1051
        %1084 = vst [vmem:[%s272 + $0xb8] sm:$0xff] %v1052
        %1085 = vst [vmem:[%s272 + $0xc0] sm:$0xff] %v1053
        %1086 = vst [vmem:[%s272 + $0xc8] sm:$0xff] %v1054
        %1087 = vst [vmem:[%s272 + $0xd0] sm:$0xff] %v1055
        %1088 = vst [vmem:[%s272 + $0xd8] sm:$0xff] %v1056
        %1089 = vst [vmem:[%s272 + $0xe0] sm:$0xff] %v1057
        %1090 = vst [vmem:[%s272 + $0xe8] sm:$0xff] %v1058
        %1091 = vst [vmem:[%s272 + $0xf0] sm:$0xff] %v1059
        %1092 = vst [vmem:[%s272 + $0xf8] sm:$0xff] %v1060
        %s1093 = sand.u32 %s181, 1
        %s1094 = scalar_lea.sflag [#allocation3], %s1093
        %s1095 = sand.u32 %s181, 1
        %s1096 = smul.addr %s1095, 256
        %s1097 = scalar_lea.vmem [#allocation2], %s1096
        // Predicated region
        $region49: #{tpu_custom_call.1} parent=47 // pred_check
          %p1098 = pneg %p191
        $region50: #{tpu_custom_call.1} parent=47 // pred_check_branch
          %1100 = sbr.rel (%p1098) target = $region52
        $region51: #{tpu_custom_call.1} parent=47 // pred_region
          %s1101 = smul.u32 32, %s21
          %1103 = vsyncadd %s1094, 0
          %s1104 = smul.addr %s1101, 8
          %s1105 = scalar_lea.hbm %s7, %s1104
          %s1106 = sshll.u32 %s1097, 4
          %s1107 = int_to_ptr.vmem [resolvable:$true] %s1106
          %s1108 = sshll.u32 %s1105, 4
          %s1109 = int_to_ptr.hbm [resolvable:$true] %s1108
          %1114 = dma.vmem_to_hbm [thread:$0]  %s1107, 4096, %s1109, %s1094, 128, 128, 8
        $region52: #{tpu_custom_call.1} parent=47 // pred_fallthru
          _
      $region48: #{tpu_custom_call.1} parent=5 // pred_fallthru
        _
      %p1115 = scmp.le.s32.totalorder 2, %s16
      // Predicated region
      $region53: #{tpu_custom_call.1} parent=5 // pred_check
        %p1116 = pneg %p1115
      $region54: #{tpu_custom_call.1} parent=5 // pred_check_branch
        %1118 = sbr.rel (%p1116) target = $region56
      $region55: #{tpu_custom_call.1} parent=5 // pred_region
        %s1119 = ssub.s32 %s16, 2
        // Predicated region
        $region57: #{tpu_custom_call.1} parent=55 // pred_check
          %p1120 = pneg %p197
        $region58: #{tpu_custom_call.1} parent=55 // pred_check_branch
          %1122 = sbr.rel (%p1120) target = $region60
        $region59: #{tpu_custom_call.1} parent=55 // pred_region
          %s1123 = sand.u32 %s182, 1
          %s1124 = scalar_lea.sflag [#allocation3], %s1123
          %s1125 = sand.u32 %s182, 1
          %s1126 = smul.addr %s1125, 256
          %s1127 = scalar_lea.vmem [#allocation2], %s1126
          %1129 = dma.done %s1124, 4096
        $region60: #{tpu_custom_call.1} parent=55 // pred_fallthru
          _
      $region56: #{tpu_custom_call.1} parent=5 // pred_fallthru
        _
    $region6: #{tpu_custom_call.1} parent=1 // loop_footer
      %s20 = sadd.s32 1, %s16
    $region7: #{tpu_custom_call.1} parent=1 // loop_footer_branch
      %15 = sbr.rel target = $region3
    $region8: #{tpu_custom_call.1} parent=1 // loop_exit
      _
    %1130 = vsyncpa [#allocation3], 1
    %s1131 = scalar_lea.sflag [#allocation3], 1
    %1132 = vsyncpa %s1131, 1

</llo_original>
